<compile_context>
chip_gen: v6e
topology: v6e:2x2x1
jax: 0.10.0
libtpu: 0.0.40
codegen_flags: <defaults>
</compile_context>

<pallas_src>
import functools
import math

import jax
import jax.numpy as jnp
from jax.experimental import pallas as pl
from jax.experimental.pallas import tpu as pltpu


# ---------------------------------------------------------------------------
# Stateless per-element PRNG (murmur3 fmix32 on a global element counter).
# Pure jnp/lax -> lowers on TPU Mosaic and in interpret mode.
# ---------------------------------------------------------------------------

def _mix32(x, seed):
    x = x ^ (seed * jnp.uint32(0x9E3779B9))
    x = (x ^ (x >> jnp.uint32(16))) * jnp.uint32(0x85EBCA6B)
    x = (x ^ (x >> jnp.uint32(13))) * jnp.uint32(0xC2B2AE35)
    return x ^ (x >> jnp.uint32(16))


def _uniform_from_bits(bits):
    # Top-24-bit uniform in [0, 1); int32/float path avoids unsigned compares.
    return ((bits >> jnp.uint32(8)).astype(jnp.int32).astype(jnp.float32)
            * jnp.float32(1.0 / (1 << 24)))


# ---------------------------------------------------------------------------
# Kernels.  Layout: x tile (TR, TC), pe tile (S1, TC) with TR a multiple of S1.
# ---------------------------------------------------------------------------

def _add_pe(x, pe):
    reps = x.shape[0] // pe.shape[0]
    if pe.shape[0] != 1 and reps > 1:
        pe = jnp.tile(pe, (reps, 1))        # sublane repeat of the PE period
    return x + pe                            # (1, TC) pe broadcasts directly


def _add_pe_kernel(x_ref, pe_ref, o_ref):
    # Eval path: add positional encoding (dropout is identity).
    o_ref[...] = _add_pe(x_ref[...], pe_ref[...]).astype(o_ref.dtype)


def _add_pe_dropout_kernel(seed_ref, x_ref, pe_ref, o_ref, *, p, total_cols):
    # Training path: add + inverted dropout (drop prob p, scale 1/(1-p)).
    y = _add_pe(x_ref[...], pe_ref[...])
    tr, tc = x_ref.shape
    i = pl.program_id(1)            # row-tile index (inner / fastest grid axis)
    j = pl.program_id(0)            # col-tile index (outer grid axis)
    r = jax.lax.broadcasted_iota(jnp.int32, (tr, tc), 0) + i * tr
    c = jax.lax.broadcasted_iota(jnp.int32, (tr, tc), 1) + j * tc
    idx = r.astype(jnp.uint32) * jnp.uint32(total_cols) + c.astype(jnp.uint32)
    u = _uniform_from_bits(_mix32(idx, seed_ref[0].astype(jnp.uint32)))
    keep = u >= jnp.float32(p)
    scale = jnp.asarray(1.0 / (1.0 - p), dtype=y.dtype)
    o_ref[...] = jnp.where(keep, y * scale, jnp.zeros_like(y)).astype(o_ref.dtype)


# ---------------------------------------------------------------------------
# PE buffer (matches the PyTorch __init__ exactly, incl. the positive exponent)
# ---------------------------------------------------------------------------

def make_pe(max_len, d_model, dtype=jnp.float32):
    # NOTE: requires even d_model (same limitation as the PyTorch original).
    position = jnp.arange(0.0, max_len, dtype=jnp.float32)[:, None]
    div_term = jnp.exp(jnp.arange(0.0, d_model, 2.0, dtype=jnp.float32)
                       * (math.log(10000.0) / d_model))
    pe = jnp.zeros((max_len, d_model), jnp.float32)
    pe = pe.at[:, 0::2].set(jnp.sin(position * div_term))
    pe = pe.at[:, 1::2].set(jnp.cos(position * div_term))
    return pe.astype(dtype)


# ---------------------------------------------------------------------------
# Layout / tiling planning
# ---------------------------------------------------------------------------

_VMEM_LIMIT_BYTES = 48 * 1024 * 1024


def _round_down(x, m):
    return (x // m) * m


def _choose_fold(batch, seq, quantum):
    """Smallest S1 dividing seq with batch*S1 % quantum == 0 (dense sublanes)."""
    if batch % quantum == 0 or batch >= quantum:
        return 1
    for s1 in range(1, seq + 1):
        if seq % s1 == 0 and (batch * s1) % quantum == 0:
            return s1
    return 1


def _plan_layout(batch, seq, d_model, itemsize):
    quantum = max(8, 32 // itemsize)            # sublane pack: 8 f32 / 16 bf16 / 32 i8
    s1 = _choose_fold(batch, seq, quantum)
    rows, cols = batch * s1, (seq // s1) * d_model
    return s1, rows, cols, quantum


def _choose_tiles(rows, cols, s1, quantum, itemsize, target_bytes):
    row_step = (s1 * quantum) // math.gcd(s1, quantum)       # lcm(s1, quantum)
    budget_elems = max(1, target_bytes // itemsize)

    # --- row tile: multiple of row_step (sublane-dense, PE-periodic), <= ~128 rows ---
    if rows < row_step:
        tr = rows                                             # full-dim block: always legal
    else:
        min_tc = cols if cols < 128 else 128
        by_budget = max(row_step, _round_down(budget_elems // min_tc, row_step))
        cap = max(row_step, _round_down(128, row_step))
        tr = max(row_step, min(_round_down(rows, row_step), cap, by_budget))

    # --- col tile: multiple of 128 (or full width), capped at the byte budget ---
    if cols % 128 == 0 and cols > 128:
        tc = min(cols, max(128, _round_down(budget_elems // tr, 128)))
    elif cols <= 128 or tr * cols * itemsize <= target_bytes:
        tc = cols                                             # full-dim block: always legal
    else:
        # cols not a multiple of 128 and too wide: 128-multiple tile with one
        # masked partial trailing tile (block dims need not divide cols).
        tc = min(_round_down(cols, 128), max(128, _round_down(budget_elems // tr, 128)))

    # v7x megacore: make sure the 'parallel' axes have >= 2 tiles when splittable.
    if pl.cdiv(rows, tr) * pl.cdiv(cols, tc) < 2:
        if tc % 256 == 0:
            tc //= 2
        elif tr % (2 * row_step) == 0:
            tr //= 2
    return tr, tc


# ---------------------------------------------------------------------------
# Wrapper
# ---------------------------------------------------------------------------

def positional_encoding(x, pe, *, dropout_p=0.0, training=False, seed=0):
    """x: (B, S, D); pe: (max_len, D).  Returns dropout(x + pe[:S]) like the module."""
    B, S, D = x.shape
    p = float(dropout_p)
    if training and p >= 1.0:
        return jnp.zeros_like(x)
    use_dropout = training and p > 0.0

    itemsize = x.dtype.itemsize
    s1, rows, cols, quantum = _plan_layout(B, S, D, itemsize)

    # Lane-dense + sublane-dense layout: rows = B*S1, cols = (S/S1)*D.
    x2 = x.reshape(rows, cols)
    pe2 = pe[:S, :].reshape(s1, cols).astype(x.dtype)   # cast once, add in x's dtype

    target_bytes = (4 if use_dropout else 8) * 1024 * 1024
    tr, tc = _choose_tiles(rows, cols, s1, quantum, itemsize, target_bytes)

    # Grid order: col tiles outer, row tiles inner -> pe's block index (0, j) is
    # constant across consecutive steps, so its tile stays resident in VMEM.
    grid = (pl.cdiv(cols, tc), pl.cdiv(rows, tr))
    compiler_params = pltpu.CompilerParams(
        dimension_semantics=("parallel", "parallel"),
        vmem_limit_bytes=_VMEM_LIMIT_BYTES,
    )
    out_shape = jax.ShapeDtypeStruct((rows, cols), x.dtype)

    if use_dropout:
        kernel = functools.partial(_add_pe_dropout_kernel, p=p, total_cols=cols)
        seed_arr = jnp.asarray([seed], dtype=jnp.int32)
        out2 = pl.pallas_call(
            kernel,
            out_shape=out_shape,
            grid_spec=pltpu.PrefetchScalarGridSpec(
                num_scalar_prefetch=1,                          # seed lives in SMEM
                grid=grid,
                in_specs=[
                    pl.BlockSpec((tr, tc), lambda j, i, seed_ref: (i, j)),  # x tile
                    pl.BlockSpec((s1, tc), lambda j, i, seed_ref: (0, j)),  # pe tile
                ],
                out_specs=pl.BlockSpec((tr, tc), lambda j, i, seed_ref: (i, j)),
            ),
            compiler_params=compiler_params,
        )(seed_arr, x2, pe2)
    else:
        out2 = pl.pallas_call(
            _add_pe_kernel,
            out_shape=out_shape,
            grid_spec=pltpu.PrefetchScalarGridSpec(
                num_scalar_prefetch=0,
                grid=grid,
                in_specs=[
                    pl.BlockSpec((tr, tc), lambda j, i: (i, j)),   # x tile
                    pl.BlockSpec((s1, tc), lambda j, i: (0, j)),   # pe tile
                ],
                out_specs=pl.BlockSpec((tr, tc), lambda j, i: (i, j)),
            ),
            compiler_params=compiler_params,
            # No input_output_aliases: with a non-donated input XLA would insert a
            # defensive full copy of x (extra read+write of x) before the kernel.
        )(x2, pe2)

    return out2.reshape(B, S, D)


# ---------------------------------------------------------------------------
# Demo / self-check
# ---------------------------------------------------------------------------

if __name__ == "__main__":
    d_model, max_len = 32, 64
    batch, seq = 2, 8
    dropout_p = 0.1
    seed = 123

    key = jax.random.PRNGKey(0)
    x = jax.random.normal(key, (batch, seq, d_model), dtype=jnp.float32)
    pe = make_pe(max_len, d_model)

    # --- eval mode (dropout == identity), like module.eval() ---
    out = jax.block_until_ready(
        positional_encoding(x, pe, dropout_p=dropout_p, training=False))
    ref = x + pe[None, :seq, :]
    assert out.shape == x.shape
    assert jnp.allclose(out, ref, atol=1e-6), "eval-mode mismatch vs reference"

    # --- training mode (inverted dropout, deterministic counter-hash mask) ---
    out_tr = jax.block_until_ready(
        positional_encoding(x, pe, dropout_p=dropout_p, training=True, seed=seed))
    s1, rows, cols, _ = _plan_layout(batch, seq, d_model, x.dtype.itemsize)
    r = jnp.arange(rows, dtype=jnp.int32)[:, None]
    c = jnp.arange(cols, dtype=jnp.int32)[None, :]
    idx = r.astype(jnp.uint32) * jnp.uint32(cols) + c.astype(jnp.uint32)
    keep = (_uniform_from_bits(_mix32(idx, jnp.uint32(seed)))
            >= jnp.float32(dropout_p)).reshape(batch, seq, d_model)
    ref_tr = jnp.where(keep, ref * jnp.asarray(1.0 / (1.0 - dropout_p), x.dtype),
                       jnp.zeros_like(ref))
    assert out_tr.shape == x.shape
    assert bool(jnp.all(jnp.isfinite(out_tr)))
    assert jnp.allclose(out_tr, ref_tr, atol=1e-5, rtol=1e-5), \
        "train-mode mismatch vs reference dropout mask"

    print("KERNEL_OK")
</pallas_src>

<mosaic_0001>
module attributes {stable_mosaic.version = 11 : i64} {
  func.func @_add_pe_kernel(%arg0: i32, %arg1: i32, %arg2: memref<8x64xf32, #tpu.memory_space<vmem>>, %arg3: memref<4x64xf32, #tpu.memory_space<vmem>>, %arg4: memref<8x64xf32, #tpu.memory_space<vmem>>) attributes {dimension_semantics = [#tpu.dimension_semantics<parallel>, #tpu.dimension_semantics<parallel>], iteration_bounds = array<i64: 1, 1>, scalar_prefetch = 0 : i64, scratch_operands = 0 : i64, tpu.core_type = #tpu.core_type<tc>, window_params = [{transform_indices = @transform_0, window_bounds = array<i64: 8, 64>}, {transform_indices = @transform_1, window_bounds = array<i64: 4, 64>}, {transform_indices = @transform_2, window_bounds = array<i64: 8, 64>}]} {
    %c0 = arith.constant 0 : index
    %c0_0 = arith.constant 0 : index
    %0 = vector.load %arg2[%c0, %c0_0] : memref<8x64xf32, #tpu.memory_space<vmem>>, vector<8x64xf32>
    %c0_1 = arith.constant 0 : index
    %c0_2 = arith.constant 0 : index
    %1 = vector.load %arg3[%c0_1, %c0_2] : memref<4x64xf32, #tpu.memory_space<vmem>>, vector<4x64xf32>
    %2 = tpu.concatenate %1, %1 in 0 : vector<4x64xf32>, vector<4x64xf32> -> vector<8x64xf32>
    %3 = arith.addf %0, %2 : vector<8x64xf32>
    %c0_3 = arith.constant 0 : index
    %c0_4 = arith.constant 0 : index
    %4 = vector.load %arg4[%c0_3, %c0_4] : memref<8x64xf32, #tpu.memory_space<vmem>>, vector<8x64xf32>
    tpu.vector_store %arg4[%c0_3, %c0_4], %3 {strides = array<i32>} : memref<8x64xf32, #tpu.memory_space<vmem>>, vector<8x64xf32>,
    return
  }
  func.func @transform_0(%arg0: i32, %arg1: i32) -> (i32, i32) {
    %c0_i32 = arith.constant 0 : i32
    return %arg1, %arg0 : i32, i32
  }
  func.func @transform_1(%arg0: i32, %arg1: i32) -> (i32, i32) {
    %c0_i32 = arith.constant 0 : i32
    %c0_i32_0 = arith.constant 0 : i32
    return %c0_i32, %arg0 : i32, i32
  }
  func.func @transform_2(%arg0: i32, %arg1: i32) -> (i32, i32) {
    %c0_i32 = arith.constant 0 : i32
    return %arg1, %arg0 : i32, i32
  }
}

</mosaic_0001>

<llo_original>
// kernel: tpu_custom_call.1
$region0: #{tpu_custom_call.1}
  #allocation0 [shape = 'u32[]', space=smem, size = 0x4, offset = 0x4, fixed_abs, tag = 'smem constant byte address 0x4 - core index']
  #allocation1 [shape = 'u32[144,128]{1,0:T(1,128)}', space=vmem, size = 0x12000, scoped, tag = 'internal scratch']
  %s0 = inlined_call_operand.hbm [shape: f32[8,64], index: 0, kind: input, shape index: {}]
  %s1 = inlined_call_operand.hbm [shape: f32[4,64], index: 1, kind: input, shape index: {}]
  %s2 = inlined_call_operand.hbm [shape: f32[8,64], index: 2, kind: output, shape index: {}]
  %s3 = sld [smem:[#allocation0]]
  $region26: #{tpu_custom_call.1} parent=0
    _
  %s5 = ssub.s32 1, %s3
  %s6 = scalar_select 0, %s5, %s3
  $region1: #{tpu_custom_call.1} parent=0
    #allocation2 [shape = 'u8[4096]{0}', space=vmem, size = 0x1000, scoped, tag = 'input window, operand 0, single buffered']
    #allocation3 [shape = 's32[1]{0}', space=sflag, size = 0x4, scoped, tag = 'scoped memory for tpu_custom_call.1']
    #allocation4 [shape = 's32[1]{0}', space=sflag, size = 0x4, scoped, tag = 'scoped memory for tpu_custom_call.1']
    #allocation5 [shape = 'u8[2048]{0}', space=vmem, size = 0x800, scoped, tag = 'input window, operand 1, single buffered']
    #allocation6 [shape = 's32[1]{0}', space=sflag, size = 0x4, scoped, tag = 'scoped memory for tpu_custom_call.1']
    #allocation7 [shape = 'u8[4096]{0}', space=vmem, size = 0x1000, scoped, tag = 'output window, operand 0, single buffered']
    %7 = vsyncpa [#allocation3], 0
    %8 = vsyncpa [#allocation6], 0
    %9 = vsyncpa [#allocation4], 0
    // Predicated region
    $region2: #{tpu_custom_call.1} parent=1 // pred_check
      _
    $region3: #{tpu_custom_call.1} parent=1 // pred_check_branch
      %11 = sbr.rel (0) target = $region5
    $region4: #{tpu_custom_call.1} parent=1 // pred_region
      %s13 = ssub.s32 128, 128
      %14 = vsyncadd [#allocation3], %s13
      %s16 = sshll.u32 [#allocation2], 4
      %s17 = int_to_ptr.vmem [resolvable:$true] %s16
      %19 = dma.hbm_to_vmem [thread:$0]  %s0, 128, %s17, [#allocation3]
    $region5: #{tpu_custom_call.1} parent=1 // pred_fallthru
      _
    // Predicated region
    $region6: #{tpu_custom_call.1} parent=1 // pred_check
      _
    $region7: #{tpu_custom_call.1} parent=1 // pred_check_branch
      %21 = sbr.rel (0) target = $region9
    $region8: #{tpu_custom_call.1} parent=1 // pred_region
      %s23 = ssub.s32 64, 64
      %24 = vsyncadd [#allocation6], %s23
      %s26 = sshll.u32 [#allocation5], 4
      %s27 = int_to_ptr.vmem [resolvable:$true] %s26
      %29 = dma.hbm_to_vmem [thread:$0]  %s1, 64, %s27, [#allocation6]
    $region9: #{tpu_custom_call.1} parent=1 // pred_fallthru
      _
    // Predicated region
    $region10: #{tpu_custom_call.1} parent=1 // pred_check
      _
    $region11: #{tpu_custom_call.1} parent=1 // pred_check_branch
      %31 = sbr.rel (0) target = $region13
    $region12: #{tpu_custom_call.1} parent=1 // pred_region
      %32 = dma.done [#allocation3], 128
    $region13: #{tpu_custom_call.1} parent=1 // pred_fallthru
      _
    // Predicated region
    $region14: #{tpu_custom_call.1} parent=1 // pred_check
      _
    $region15: #{tpu_custom_call.1} parent=1 // pred_check_branch
      %34 = sbr.rel (0) target = $region17
    $region16: #{tpu_custom_call.1} parent=1 // pred_region
      %35 = dma.done [#allocation6], 64
    $region17: #{tpu_custom_call.1} parent=1 // pred_fallthru
      _
    %v36 = vld [vmem:[#allocation2] sm:$0xff]
    %v37 = vld [vmem:[#allocation5] sm:$0xf]
    %v39 = vrot.slane %v37, 4
    %vm41 = vcmask 1043456
    %v42 = vsel %vm41, %v37, %v39
    %v43 = vadd.f32 %v36, %v42
    %vm44 = vcmask 523264
    %45 = vst.msk [vmem:[#allocation7] sm:$0xff] %vm44, %v43
    // Predicated region
    $region18: #{tpu_custom_call.1} parent=1 // pred_check
      _
    $region19: #{tpu_custom_call.1} parent=1 // pred_check_branch
      %47 = sbr.rel (0) target = $region21
    $region20: #{tpu_custom_call.1} parent=1 // pred_region
      %s49 = ssub.s32 128, 128
      %50 = vsyncadd [#allocation4], %s49
      %s52 = sshll.u32 [#allocation7], 4
      %s53 = int_to_ptr.vmem [resolvable:$true] %s52
      %55 = dma.vmem_to_hbm [thread:$0]  %s53, 128, %s2, [#allocation4]
    $region21: #{tpu_custom_call.1} parent=1 // pred_fallthru
      _
    // Predicated region
    $region22: #{tpu_custom_call.1} parent=1 // pred_check
      _
    $region23: #{tpu_custom_call.1} parent=1 // pred_check_branch
      %57 = sbr.rel (0) target = $region25
    $region24: #{tpu_custom_call.1} parent=1 // pred_region
      %58 = dma.done [#allocation4], 128
    $region25: #{tpu_custom_call.1} parent=1 // pred_fallthru
      _
    %59 = vsyncpa [#allocation3], 1
    %60 = vsyncpa [#allocation6], 1
    %61 = vsyncpa [#allocation4], 1

</llo_original>
